<compile_context>
chip_gen: v5e
topology: v5e:2x2
jax: 0.10.0
libtpu: 0.0.40
codegen_flags: <defaults>
</compile_context>

<pallas_src>
import functools

import jax
import jax.numpy as jnp
from jax import lax
from jax.experimental import pallas as pl
from jax.experimental.pallas import tpu as pltpu

EPS = 1e-5  # matches torch.nn.LayerNorm default


def _round_up(a, b):
    return ((a + b - 1) // b) * b


def _cdiv(a, b):
    return (a + b - 1) // b


def _vmem_capacity_bytes():
    # Generation-aware cap (v5e/v6e: 128 MiB, v7x: 64 MiB).  Fall back to the
    # most conservative figure if the query is unavailable.
    try:
        return int(pltpu.get_tpu_info().vmem_capacity_bytes)
    except Exception:
        return 64 << 20


def prenorm_kernel(x_ref, g_ref, b_ref, w_ref, wb_ref, o_ref, *,
                   chunk, precision, mxu_dtype):
    """One (tm, D) row tile x one (D, tn) weight column tile.

    LayerNorm stats are computed in f32 over the full (real) feature axis.
    The row tile is processed in `chunk`-row sub-chunks inside an unrolled
    fori_loop so LN (VPU/XLU/EUP) of chunk k+1 can co-issue with the matmul
    (MXU) of chunk k.
    """
    d = x_ref.shape[1]
    inv_d = 1.0 / d
    n_chunks = x_ref.shape[0] // chunk

    g = g_ref[...].astype(jnp.float32)        # (1, D)
    b = b_ref[...].astype(jnp.float32)        # (1, D)
    wb = wb_ref[...].astype(jnp.float32)      # (1, tn)
    w = w_ref[...]                            # (D, tn), native dtype
    if mxu_dtype is not None:
        w = w.astype(mxu_dtype)
    y_dtype = mxu_dtype if mxu_dtype is not None else x_ref.dtype

    def body(k, carry):
        r = pl.multiple_of(k * chunk, chunk)
        x = x_ref[pl.ds(r, chunk), :].astype(jnp.float32)
        # Fused statistics: E[x] and E[x^2] in a single elementwise pass.
        mean = jnp.sum(x, axis=-1, keepdims=True) * inv_d
        ex2 = jnp.sum(x * x, axis=-1, keepdims=True) * inv_d
        var = ex2 - mean * mean                        # biased var (torch LN)
        y = ((x - mean) * lax.rsqrt(var + EPS)) * g + b
        y = y.astype(y_dtype)                          # feed MXU in input dtype
        out = jnp.dot(y, w, precision=precision,
                      preferred_element_type=jnp.float32) + wb
        o_ref[pl.ds(r, chunk), :] = out.astype(o_ref.dtype)
        return carry

    lax.fori_loop(0, n_chunks, body, 0, unroll=True)


def prenorm(x, gamma, beta, w, wb, *, tm=512, chunk=256, tn_max=512,
            use_bf16_matmul=False):
    """PreNorm with fn = Linear(D, D): returns LayerNorm(x) @ w + wb.

    x: (B, N, D); gamma/beta/wb: (D,); w: (D, D).
    """
    B, N, D = x.shape
    M = B * N
    x2 = x.reshape(M, D)           # contiguous reshape: no copy
    g2 = gamma.reshape(1, D)
    b2 = beta.reshape(1, D)
    wb2 = wb.reshape(1, D)

    itm_x = jnp.dtype(x.dtype).itemsize
    itm_w = jnp.dtype(w.dtype).itemsize
    pack = max(8, 32 // itm_x)     # sublane pack: 8 for f32, 16 for bf16

    # Row tile: dtype-aware sublane multiple; force >= 2 (ideally >= 4) row
    # grid steps so the "parallel" axis can shard across v7x's two TCs.
    tm = _round_up(max(pack, min(tm, 1024)), pack)
    tm = min(tm, _round_up(max(1, _cdiv(M, 4)), pack))
    tm = max(tm, pack)

    # Generation-aware VMEM budget.
    cap = _vmem_capacity_bytes()
    cap_limit = max(cap - (8 << 20), 16 << 20)     # leave internal-scratch headroom

    # Weight column tile: keep the whole (D, D) weight VMEM-resident when its
    # (double-buffered) block fits comfortably, else stream (D, tn) column
    # tiles along a second grid axis.
    w_block_budget = min(24 << 20, cap_limit // 2)
    if D <= 256 or 2 * D * D * itm_w <= w_block_budget:
        tn = D
        n_col = 1
    else:
        tn = (w_block_budget // (2 * D * itm_w)) // 128 * 128
        tn = int(max(128, min(tn, max(128, (tn_max // 128) * 128))))
        n_col = _cdiv(D, tn)

    def _need(tm_):
        ck = max(pack, min(chunk, tm_))
        return (2 * tm_ * D * itm_x          # x tiles (double-buffered)
                + 2 * tm_ * tn * itm_x       # out tiles (double-buffered)
                + 2 * D * tn * itm_w         # weight blocks
                + 6 * D * 4 + 2 * tn * 4     # gamma/beta/bias
                + 4 * ck * D * 4)            # f32 per-chunk intermediates

    while tm > pack and _need(tm) + _need(tm) // 2 + (4 << 20) > cap_limit:
        tm = max(pack, _round_up(tm // 2, pack))

    # Chunk size: multiple of the sublane pack and an exact divisor of tm.
    chunk = max(pack, (min(chunk, tm) // pack) * pack)
    while tm % chunk:
        chunk -= pack

    n_row = _cdiv(M, tm)
    need = _need(tm)
    vmem_limit = int(min(max(need + need // 2 + (4 << 20), 32 << 20), cap_limit))

    # Matmul dtype / precision policy.
    if use_bf16_matmul and x.dtype == jnp.float32:
        mxu_dtype = jnp.bfloat16                       # opt-in fast path (v5e)
    else:
        mxu_dtype = None
    if mxu_dtype is None and x.dtype == jnp.float32 and w.dtype == jnp.float32:
        precision = lax.Precision.HIGHEST              # full-f32 MXU path
    else:
        precision = lax.Precision.DEFAULT

    w_bytes = D * D * itm_w * (1 if n_col == 1 else n_row)
    cost = pl.CostEstimate(
        flops=2 * M * D * D + 8 * M * D,
        transcendentals=M,                              # one rsqrt per row
        bytes_accessed=2 * M * D * itm_x + w_bytes + 3 * D * 4,
    )

    kernel = functools.partial(prenorm_kernel, chunk=chunk,
                               precision=precision, mxu_dtype=mxu_dtype)

    out = pl.pallas_call(
        kernel,
        out_shape=jax.ShapeDtypeStruct((M, D), x.dtype),
        grid_spec=pltpu.PrefetchScalarGridSpec(
            num_scalar_prefetch=0,
            grid=(n_row, n_col),
            in_specs=[
                pl.BlockSpec((tm, D), lambda i, j: (i, 0)),   # x row tile (reused across j)
                pl.BlockSpec((1, D), lambda i, j: (0, 0)),    # gamma (fetched once)
                pl.BlockSpec((1, D), lambda i, j: (0, 0)),    # beta  (fetched once)
                pl.BlockSpec((D, tn), lambda i, j: (0, j)),   # fn weight (resident if n_col==1)
                pl.BlockSpec((1, tn), lambda i, j: (0, j)),   # fn bias
            ],
            out_specs=pl.BlockSpec((tm, tn), lambda i, j: (i, j)),
        ),
        compiler_params=pltpu.CompilerParams(
            dimension_semantics=("parallel", "arbitrary"),
            vmem_limit_bytes=vmem_limit,
        ),
        cost_estimate=cost,
    )(x2, g2, b2, w, wb2)

    return out.reshape(B, N, D)


def prenorm_ref(x, gamma, beta, w, wb):
    xf = x.astype(jnp.float32)
    mean = jnp.mean(xf, axis=-1, keepdims=True)
    var = jnp.mean((xf - mean) ** 2, axis=-1, keepdims=True)
    xn = (xf - mean) / jnp.sqrt(var + EPS)
    y = xn * gamma + beta
    out = jnp.dot(y, w, precision=lax.Precision.HIGHEST) + wb
    return out.astype(x.dtype)


if __name__ == "__main__":
    # TODO(synk): `fn` is an arbitrary sub-module in PyTorch; it is realized
    # here as Linear(dim, dim) fused after the LayerNorm.
    B, N, D = 2, 8, 32
    key = jax.random.PRNGKey(0)
    kx, kw, kb, kx2 = jax.random.split(key, 4)

    x = jax.random.normal(kx, (B, N, D), dtype=jnp.float32)
    gamma = jnp.ones((D,), jnp.float32)   # torch LayerNorm default init
    beta = jnp.zeros((D,), jnp.float32)
    w = jax.random.normal(kw, (D, D), dtype=jnp.float32) * (1.0 / jnp.sqrt(D))
    wb = jax.random.normal(kb, (D,), dtype=jnp.float32) * 0.02

    out = prenorm(x, gamma, beta, w, wb)
    jax.block_until_ready(out)
    ref = prenorm_ref(x, gamma, beta, w, wb)
    assert out.shape == (B, N, D)
    assert jnp.allclose(out, ref, atol=1e-4, rtol=1e-4), "mismatch vs reference"

    # Non-divisible rows / non-128-multiple feature dim: exercises the
    # cdiv-grid masked-output path (no host-side padding anywhere).
    B2, N2, D2 = 2, 7, 48
    x_b = jax.random.normal(kx2, (B2, N2, D2), dtype=jnp.float32)
    g_b = jnp.full((D2,), 1.1, jnp.float32)
    b_b = jnp.full((D2,), 0.05, jnp.float32)
    w_b = jax.random.normal(kw, (D2, D2), dtype=jnp.float32) * (1.0 / jnp.sqrt(D2))
    wb_b = jnp.zeros((D2,), jnp.float32)
    out_b = prenorm(x_b, g_b, b_b, w_b, wb_b)
    jax.block_until_ready(out_b)
    ref_b = prenorm_ref(x_b, g_b, b_b, w_b, wb_b)
    assert jnp.allclose(out_b, ref_b, atol=1e-4, rtol=1e-4), "mismatch (ragged case)"

    print("KERNEL_OK")
</pallas_src>

<mosaic_0001>
module attributes {stable_mosaic.version = 11 : i64} {
  func.func @prenorm_kernel(%arg0: i32, %arg1: i32, %arg2: memref<8x32xf32, #tpu.memory_space<vmem>>, %arg3: memref<1x32xf32, #tpu.memory_space<vmem>>, %arg4: memref<1x32xf32, #tpu.memory_space<vmem>>, %arg5: memref<32x32xf32, #tpu.memory_space<vmem>>, %arg6: memref<1x32xf32, #tpu.memory_space<vmem>>, %arg7: memref<8x32xf32, #tpu.memory_space<vmem>>) attributes {dimension_semantics = [#tpu.dimension_semantics<parallel>, #tpu.dimension_semantics<arbitrary>], iteration_bounds = array<i64: 2, 1>, scalar_prefetch = 0 : i64, scratch_operands = 0 : i64, tpu.core_type = #tpu.core_type<tc>, window_params = [{transform_indices = @transform_0, window_bounds = array<i64: 8, 32>}, {pipeline_mode = #tpu.pipeline_mode<synchronous>, transform_indices = @transform_1, window_bounds = array<i64: 1, 32>}, {pipeline_mode = #tpu.pipeline_mode<synchronous>, transform_indices = @transform_2, window_bounds = array<i64: 1, 32>}, {transform_indices = @transform_3, window_bounds = array<i64: 32, 32>}, {transform_indices = @transform_4, window_bounds = array<i64: 1, 32>}, {transform_indices = @transform_5, window_bounds = array<i64: 8, 32>}]} {
    %c0 = arith.constant 0 : index
    %c0_0 = arith.constant 0 : index
    %0 = vector.load %arg3[%c0, %c0_0] : memref<1x32xf32, #tpu.memory_space<vmem>>, vector<1x32xf32>
    %c0_1 = arith.constant 0 : index
    %c0_2 = arith.constant 0 : index
    %1 = vector.load %arg4[%c0_1, %c0_2] : memref<1x32xf32, #tpu.memory_space<vmem>>, vector<1x32xf32>
    %c0_3 = arith.constant 0 : index
    %c0_4 = arith.constant 0 : index
    %2 = vector.load %arg6[%c0_3, %c0_4] : memref<1x32xf32, #tpu.memory_space<vmem>>, vector<1x32xf32>
    %c0_5 = arith.constant 0 : index
    %c0_6 = arith.constant 0 : index
    %3 = vector.load %arg5[%c0_5, %c0_6] : memref<32x32xf32, #tpu.memory_space<vmem>>, vector<32x32xf32>
    %c0_i32 = arith.constant 0 : i32
    %c8_i32 = arith.constant 8 : i32
    %4 = arith.muli %c0_i32, %c8_i32 : i32
    %5 = tpu.assume_multiple %4, 8 : i32
    %6 = arith.index_cast %5 : i32 to index
    %c0_7 = arith.constant 0 : index
    %7 = vector.load %arg2[%6, %c0_7] : memref<8x32xf32, #tpu.memory_space<vmem>>, vector<8x32xf32>
    %cst = arith.constant dense<0.000000e+00> : vector<8xf32>
    %8 = vector.multi_reduction <add>, %7, %cst [1] : vector<8x32xf32> to vector<8xf32>
    %9 = vector.shape_cast %8 : vector<8xf32> to vector<8x1xf32>
    %cst_8 = arith.constant 3.125000e-02 : f32
    %10 = vector.broadcast %cst_8 : f32 to vector<8x1xf32>
    %11 = arith.mulf %9, %10 : vector<8x1xf32>
    %12 = arith.mulf %7, %7 : vector<8x32xf32>
    %cst_9 = arith.constant dense<0.000000e+00> : vector<8xf32>
    %13 = vector.multi_reduction <add>, %12, %cst_9 [1] : vector<8x32xf32> to vector<8xf32>
    %14 = vector.shape_cast %13 : vector<8xf32> to vector<8x1xf32>
    %cst_10 = arith.constant 3.125000e-02 : f32
    %15 = vector.broadcast %cst_10 : f32 to vector<8x1xf32>
    %16 = arith.mulf %14, %15 : vector<8x1xf32>
    %17 = arith.mulf %11, %11 : vector<8x1xf32>
    %18 = arith.subf %16, %17 : vector<8x1xf32>
    %19 = vector.broadcast %11 : vector<8x1xf32> to vector<8x32xf32>
    %20 = arith.subf %7, %19 : vector<8x32xf32>
    %cst_11 = arith.constant 9.99999974E-6 : f32
    %21 = vector.broadcast %cst_11 : f32 to vector<8x1xf32>
    %22 = arith.addf %18, %21 : vector<8x1xf32>
    %23 = math.rsqrt %22 : vector<8x1xf32>
    %24 = vector.broadcast %23 : vector<8x1xf32> to vector<8x32xf32>
    %25 = arith.mulf %20, %24 : vector<8x32xf32>
    %26 = vector.broadcast %0 : vector<1x32xf32> to vector<8x32xf32>
    %27 = arith.mulf %25, %26 : vector<8x32xf32>
    %28 = vector.broadcast %1 : vector<1x32xf32> to vector<8x32xf32>
    %29 = arith.addf %27, %28 : vector<8x32xf32>
    %cst_12 = arith.constant dense<0.000000e+00> : vector<8x32xf32>
    %30 = tpu.matmul %29, %3, %cst_12 {dimension_numbers = #tpu.dot_dimension_numbers<[1], [0], [0], [1], [0, 0, 1, 1], [], []>, precision = #tpu.contract_precision<fp32>} : vector<8x32xf32>, vector<32x32xf32>, vector<8x32xf32> -> vector<8x32xf32>
    %31 = vector.broadcast %2 : vector<1x32xf32> to vector<8x32xf32>
    %32 = arith.addf %30, %31 : vector<8x32xf32>
    %33 = arith.index_cast %5 : i32 to index
    %c0_13 = arith.constant 0 : index
    %34 = vector.load %arg7[%33, %c0_13] : memref<8x32xf32, #tpu.memory_space<vmem>>, vector<8x32xf32>
    tpu.vector_store %arg7[%33, %c0_13], %32 {strides = array<i32>} : memref<8x32xf32, #tpu.memory_space<vmem>>, vector<8x32xf32>,
    %c1_i32 = arith.constant 1 : i32
    return
  }
  func.func @transform_0(%arg0: i32, %arg1: i32) -> (i32, i32) {
    %c0_i32 = arith.constant 0 : i32
    %c0_i32_0 = arith.constant 0 : i32
    return %arg0, %c0_i32 : i32, i32
  }
  func.func @transform_1(%arg0: i32, %arg1: i32) -> (i32, i32) {
    %c0_i32 = arith.constant 0 : i32
    %c0_i32_0 = arith.constant 0 : i32
    %c0_i32_1 = arith.constant 0 : i32
    return %c0_i32, %c0_i32_0 : i32, i32
  }
  func.func @transform_2(%arg0: i32, %arg1: i32) -> (i32, i32) {
    %c0_i32 = arith.constant 0 : i32
    %c0_i32_0 = arith.constant 0 : i32
    %c0_i32_1 = arith.constant 0 : i32
    return %c0_i32, %c0_i32_0 : i32, i32
  }
  func.func @transform_3(%arg0: i32, %arg1: i32) -> (i32, i32) {
    %c0_i32 = arith.constant 0 : i32
    %c0_i32_0 = arith.constant 0 : i32
    return %c0_i32, %arg1 : i32, i32
  }
  func.func @transform_4(%arg0: i32, %arg1: i32) -> (i32, i32) {
    %c0_i32 = arith.constant 0 : i32
    %c0_i32_0 = arith.constant 0 : i32
    return %c0_i32, %arg1 : i32, i32
  }
  func.func @transform_5(%arg0: i32, %arg1: i32) -> (i32, i32) {
    %c0_i32 = arith.constant 0 : i32
    return %arg0, %arg1 : i32, i32
  }
}

</mosaic_0001>

<llo_original>
// kernel: tpu_custom_call.1
$region0: #{tpu_custom_call.1}
  #allocation0 [shape = 'u32[]', space=smem, size = 0x4, offset = 0x4, fixed_abs, tag = 'smem constant byte address 0x4 - core index']
  #allocation1 [shape = 'u32[72,128]{1,0:T(1,128)}', space=vmem, size = 0x9000, scoped, tag = 'internal scratch']
  %s0 = inlined_call_operand.hbm [shape: f32[16,32], index: 0, kind: input, shape index: {}]
  %s1 = inlined_call_operand.hbm [shape: f32[1,32], index: 1, kind: input, shape index: {}]
  %s2 = inlined_call_operand.vmem [shape: f32[1,32], index: 2, kind: input, shape index: {}]
  %s3 = inlined_call_operand.hbm [shape: f32[32,32], index: 3, kind: input, shape index: {}]
  %s4 = inlined_call_operand.vmem [shape: f32[1,32], index: 4, kind: input, shape index: {}]
  %s5 = inlined_call_operand.hbm [shape: f32[16,32], index: 5, kind: output, shape index: {}]
  %s6 = sld [smem:[#allocation0]]
  $region65: #{tpu_custom_call.1} parent=0
    _
  %s8 = ssub.s32 1, %s6
  %s9 = scalar_select 0, %s8, %s6
  $region1: #{tpu_custom_call.1} parent=0
    #allocation2 [shape = 'u8[8192]{0}', space=vmem, size = 0x2000, scoped, tag = 'input window, operand 0']
    #allocation3 [shape = 's32[2]{0}', space=sflag, size = 0x8, scoped, tag = 'scoped memory for tpu_custom_call.1']
    #allocation4 [shape = 's32[2]{0}', space=sflag, size = 0x8, scoped, tag = 'scoped memory for tpu_custom_call.1']
    #allocation5 [shape = 'u8[512]{0}', space=vmem, size = 0x400, scoped, tag = 'input window, operand 1, single buffered']
    #allocation6 [shape = 's32[1]{0}', space=sflag, size = 0x4, scoped, tag = 'scoped memory for tpu_custom_call.1']
    #allocation7 [shape = 'u8[16384]{0}', space=vmem, size = 0x4000, scoped, tag = 'input window, operand 3, single buffered']
    #allocation8 [shape = 'u8[8192]{0}', space=vmem, size = 0x2000, scoped, tag = 'output window, operand 0']
    %10 = vsyncpa [#allocation3], 0
    %s11 = scalar_lea.sflag [#allocation3], 1
    %12 = vsyncpa %s11, 0
    %13 = vsyncpa [#allocation6], 0
    %14 = vsyncpa [#allocation4], 0
    %s15 = scalar_lea.sflag [#allocation4], 1
    %16 = vsyncpa %s15, 0
    loop: start=0, step=1, limit=4
    $region2: #{tpu_custom_call.1} parent=1 // loop_pre_header
      _
    $region3: #{tpu_custom_call.1} parent=1 // loop_header
      %s18 = sphi 0, %s22
      %p19 = scmp.ge.s32.totalorder %s18, 4
      %s25 = sphi 0, %s37
      %s26 = sphi 0, %s33
      %s27 = sphi 0, %s25
      %s28 = sphi 0, %s26
      %s29 = sphi 0, %s27
      %s30 = sphi 0, %s28
      %s40 = sphi 0, %s42
      %s43 = sphi 0, %s40
      %s44 = sphi 0, %s43
      %s60 = sphi 0, %s44
      %s64 = sphi 0, %s64
      %s66 = sphi 0, %s64
      %s67 = sphi 0, %s66
      %s81 = sphi 0, %s67
      %s85 = sphi 0, %s85
      %s87 = sphi 0, %s85
      %s88 = sphi 0, %s87
      %s102 = sphi 0, %s88
      %s108 = sphi 0, %s110
      %s111 = sphi 0, %s108
      %s112 = sphi 0, %s111
      %s128 = sphi 0, %s112
      %s134 = sphi 0, %s136
      %s137 = sphi 0, %s134
      %s138 = sphi 0, %s137
      %s154 = sphi 0, %s138
      %s162 = sphi 0, %s164
      %s165 = sphi 0, %s162
      %s166 = sphi 0, %s165
      %s182 = sphi 0, %s166
    $region4: #{tpu_custom_call.1} parent=1 // loop_header_branch
      %21 = sbr.rel (%p19) target = $region8
    $region5: #{tpu_custom_call.1} parent=1 // loop_body
      %s23 = ssub.s32 %s18, 1
      %s24 = ssub.s32 %s18, 2
      %s31 = sadd.s32 1, %s26
      %p32 = scmp.ge.s32.totalorder %s31, 1
      %s33 = scalar_select %p32, 0, %s31
      %s34 = sadd.s32 1, %s25
      %s35 = scalar_select %p32, %s34, %s25
      %p36 = scmp.ge.s32.totalorder %s35, 2
      %s37 = scalar_select %p36, 0, %s35
      %s38 = ssub.s32 %s25, %s37
      %p39 = scmp.eq.s32.totalorder %s38, 0
      %s41 = sadd.s32 %s40, 1
      %s42 = scalar_select %p39, %s40, %s41
      %p45 = pneg %p39
      %p46 = scmp.eq.s32.totalorder %s18, 1
      %p47 = por %p45, %p46
      %p48 = scmp.ne.s32.totalorder %s40, %s43
      %p49 = scmp.eq.s32.totalorder %s18, 0
      %p50 = por %p48, %p49
      %p51 = scmp.ne.s32.totalorder %s40, %s43
      %p52 = scmp.eq.s32.totalorder %s23, 1
      %p53 = por %p51, %p52
      %p54 = scmp.ne.s32.totalorder %s43, %s44
      %p55 = scmp.eq.s32.totalorder %s23, 0
      %p56 = por %p54, %p55
      %p57 = scmp.ne.s32.totalorder %s43, %s44
      %p58 = scmp.eq.s32.totalorder %s24, 1
      %p59 = por %p57, %p58
      %p61 = scmp.ne.s32.totalorder %s44, %s60
      %p62 = scmp.eq.s32.totalorder %s24, 0
      %p63 = por %p61, %p62
      %s65 = sadd.s32 %s64, 1
      %p68 = scmp.eq.s32.totalorder %s18, 1
      %p69 = scmp.ne.s32.totalorder %s64, %s66
      %p70 = scmp.eq.s32.totalorder %s18, 0
      %p71 = por %p69, %p70
      %p72 = scmp.ne.s32.totalorder %s64, %s66
      %p73 = scmp.eq.s32.totalorder %s23, 1
      %p74 = por %p72, %p73
      %p75 = scmp.ne.s32.totalorder %s66, %s67
      %p76 = scmp.eq.s32.totalorder %s23, 0
      %p77 = por %p75, %p76
      %p78 = scmp.ne.s32.totalorder %s66, %s67
      %p79 = scmp.eq.s32.totalorder %s24, 1
      %p80 = por %p78, %p79
      %p82 = scmp.ne.s32.totalorder %s67, %s81
      %p83 = scmp.eq.s32.totalorder %s24, 0
      %p84 = por %p82, %p83
      %s86 = sadd.s32 %s85, 1
      %p89 = scmp.eq.s32.totalorder %s18, 1
      %p90 = scmp.ne.s32.totalorder %s85, %s87
      %p91 = scmp.eq.s32.totalorder %s18, 0
      %p92 = por %p90, %p91
      %p93 = scmp.ne.s32.totalorder %s85, %s87
      %p94 = scmp.eq.s32.totalorder %s23, 1
      %p95 = por %p93, %p94
      %p96 = scmp.ne.s32.totalorder %s87, %s88
      %p97 = scmp.eq.s32.totalorder %s23, 0
      %p98 = por %p96, %p97
      %p99 = scmp.ne.s32.totalorder %s87, %s88
      %p100 = scmp.eq.s32.totalorder %s24, 1
      %p101 = por %p99, %p100
      %p103 = scmp.ne.s32.totalorder %s88, %s102
      %p104 = scmp.eq.s32.totalorder %s24, 0
      %p105 = por %p103, %p104
      %s106 = ssub.s32 %s26, %s33
      %p107 = scmp.eq.s32.totalorder %s106, 0
      %s109 = sadd.s32 %s108, 1
      %s110 = scalar_select %p107, %s108, %s109
      %p113 = pneg %p107
      %p114 = scmp.eq.s32.totalorder %s18, 1
      %p115 = por %p113, %p114
      %p116 = scmp.ne.s32.totalorder %s108, %s111
      %p117 = scmp.eq.s32.totalorder %s18, 0
      %p118 = por %p116, %p117
      %p119 = scmp.ne.s32.totalorder %s108, %s111
      %p120 = scmp.eq.s32.totalorder %s23, 1
      %p121 = por %p119, %p120
      %p122 = scmp.ne.s32.totalorder %s111, %s112
      %p123 = scmp.eq.s32.totalorder %s23, 0
      %p124 = por %p122, %p123
      %p125 = scmp.ne.s32.totalorder %s111, %s112
      %p126 = scmp.eq.s32.totalorder %s24, 1
      %p127 = por %p125, %p126
      %p129 = scmp.ne.s32.totalorder %s112, %s128
      %p130 = scmp.eq.s32.totalorder %s24, 0
      %p131 = por %p129, %p130
      %s132 = ssub.s32 %s26, %s33
      %p133 = scmp.eq.s32.totalorder %s132, 0
      %s135 = sadd.s32 %s134, 1
      %s136 = scalar_select %p133, %s134, %s135
      %p139 = pneg %p133
      %p140 = scmp.eq.s32.totalorder %s18, 1
      %p141 = por %p139, %p140
      %p142 = scmp.ne.s32.totalorder %s134, %s137
      %p143 = scmp.eq.s32.totalorder %s18, 0
      %p144 = por %p142, %p143
      %p145 = scmp.ne.s32.totalorder %s134, %s137
      %p146 = scmp.eq.s32.totalorder %s23, 1
      %p147 = por %p145, %p146
      %p148 = scmp.ne.s32.totalorder %s137, %s138
      %p149 = scmp.eq.s32.totalorder %s23, 0
      %p150 = por %p148, %p149
      %p151 = scmp.ne.s32.totalorder %s137, %s138
      %p152 = scmp.eq.s32.totalorder %s24, 1
      %p153 = por %p151, %p152
      %p155 = scmp.ne.s32.totalorder %s138, %s154
      %p156 = scmp.eq.s32.totalorder %s24, 0
      %p157 = por %p155, %p156
      %s158 = ssub.s32 %s25, %s37
      %s159 = ssub.s32 %s26, %s33
      %s160 = sor.u32 %s158, %s159
      %p161 = scmp.eq.s32.totalorder %s160, 0
      %s163 = sadd.s32 %s162, 1
      %s164 = scalar_select %p161, %s162, %s163
      %p167 = pneg %p161
      %p168 = scmp.eq.s32.totalorder %s18, 1
      %p169 = por %p167, %p168
      %p170 = scmp.ne.s32.totalorder %s162, %s165
      %p171 = scmp.eq.s32.totalorder %s18, 0
      %p172 = por %p170, %p171
      %p173 = scmp.ne.s32.totalorder %s162, %s165
      %p174 = scmp.eq.s32.totalorder %s23, 1
      %p175 = por %p173, %p174
      %p176 = scmp.ne.s32.totalorder %s165, %s166
      %p177 = scmp.eq.s32.totalorder %s23, 0
      %p178 = por %p176, %p177
      %p179 = scmp.ne.s32.totalorder %s165, %s166
      %p180 = scmp.eq.s32.totalorder %s24, 1
      %p181 = por %p179, %p180
      %p183 = scmp.ne.s32.totalorder %s166, %s182
      %p184 = scmp.eq.s32.totalorder %s24, 0
      %p185 = por %p183, %p184
      %p186 = scmp.le.s32.totalorder 1, %s18
      %p187 = scmp.lt.s32.totalorder %s18, 3
      %p188 = pnand %p186, %p187
      %p189 = pneg %p188
      // Predicated region
      $region9: #{tpu_custom_call.1} parent=5 // pred_check
        _
      $region10: #{tpu_custom_call.1} parent=5 // pred_check_branch
        %191 = sbr.rel (%p188) target = $region12
      $region11: #{tpu_custom_call.1} parent=5 // pred_region
        %s192 = ssub.s32 %s18, 1
        // Predicated region
        $region13: #{tpu_custom_call.1} parent=11 // pred_check
          %p193 = pneg %p77
        $region14: #{tpu_custom_call.1} parent=11 // pred_check_branch
          %195 = sbr.rel (%p193) target = $region16
        $region15: #{tpu_custom_call.1} parent=11 // pred_region
          %197 = vsyncadd [#allocation6], 0
          %s199 = sshll.u32 %s1, 4
          %s200 = int_to_ptr.hbm [resolvable:$true] %s199
          %s201 = sshll.u32 [#allocation5], 4
          %s202 = int_to_ptr.vmem [resolvable:$true] %s201
          %204 = dma.hbm_to_vmem [thread:$0]  %s200, 16, %s202, [#allocation6]
        $region16: #{tpu_custom_call.1} parent=11 // pred_fallthru
          _
        // Predicated region
        $region17: #{tpu_custom_call.1} parent=11 // pred_check
          %p205 = pneg %p98
        $region18: #{tpu_custom_call.1} parent=11 // pred_check_branch
          %207 = sbr.rel (%p205) target = $region20
        $region19: #{tpu_custom_call.1} parent=11 // pred_region
          _
        $region20: #{tpu_custom_call.1} parent=11 // pred_fallthru
          _
        // Predicated region
        $region21: #{tpu_custom_call.1} parent=11 // pred_check
          %p208 = pneg %p124
        $region22: #{tpu_custom_call.1} parent=11 // pred_check_branch
          %210 = sbr.rel (%p208) target = $region24
        $region23: #{tpu_custom_call.1} parent=11 // pred_region
          %212 = vsyncadd [#allocation6], 0
          %s213 = smul.addr %s28, 8
          %s214 = scalar_lea.hbm %s3, %s213
          %s215 = sshll.u32 %s214, 4
          %s216 = int_to_ptr.hbm [resolvable:$true] %s215
          %s217 = sshll.u32 [#allocation7], 4
          %s218 = int_to_ptr.vmem [resolvable:$true] %s217
          %223 = dma.hbm_to_vmem [thread:$0]  %s216, 512, %s218, [#allocation6], 128, 128, 8
        $region24: #{tpu_custom_call.1} parent=11 // pred_fallthru
          _
        // Predicated region
        $region25: #{tpu_custom_call.1} parent=11 // pred_check
          %p224 = pneg %p150
        $region26: #{tpu_custom_call.1} parent=11 // pred_check_branch
          %226 = sbr.rel (%p224) target = $region28
        $region27: #{tpu_custom_call.1} parent=11 // pred_region
          %p227 = scmp.lt.s32.totalorder %s28, 0
          %s228 = scalar_select %p227, %s28, 0
          %s229 = scalar_lea.vmem %s4, %s228
        $region28: #{tpu_custom_call.1} parent=11 // pred_fallthru
          _
      $region12: #{tpu_custom_call.1} parent=5 // pred_fallthru
        _
      %p230 = scmp.lt.s32.totalorder %s18, 2
      // Predicated region
      $region29: #{tpu_custom_call.1} parent=5 // pred_check
        %p231 = pneg %p230
      $region30: #{tpu_custom_call.1} parent=5 // pred_check_branch
        %233 = sbr.rel (%p231) target = $region32
      $region31: #{tpu_custom_call.1} parent=5 // pred_region
        // Predicated region
        $region33: #{tpu_custom_call.1} parent=31 // pred_check
          %p234 = pneg %p50
        $region34: #{tpu_custom_call.1} parent=31 // pred_check_branch
          %236 = sbr.rel (%p234) target = $region36
        $region35: #{tpu_custom_call.1} parent=31 // pred_region
          %s237 = sand.u32 %s40, 1
          %s238 = scalar_lea.sflag [#allocation3], %s237
          %s239 = sand.u32 %s40, 1
          %s240 = smul.addr %s239, 8
          %s241 = scalar_lea.vmem [#allocation2], %s240
          %243 = vsyncadd %s238, 0
          %s244 = smul.addr %s25, 8
          %s245 = scalar_lea.hbm %s0, %s244
          %s247 = sshll.u32 %s245, 4
          %s248 = int_to_ptr.hbm [resolvable:$true] %s247
          %s249 = sshll.u32 %s241, 4
          %s250 = int_to_ptr.vmem [resolvable:$true] %s249
          %252 = dma.hbm_to_vmem [thread:$0]  %s248, 128, %s250, %s238
        $region36: #{tpu_custom_call.1} parent=31 // pred_fallthru
          _
      $region32: #{tpu_custom_call.1} parent=5 // pred_fallthru
        _
      %p253 = scmp.le.s32.totalorder 1, %s18
      %p254 = scmp.lt.s32.totalorder %s18, 3
      %p255 = pnand %p253, %p254
      %p256 = pneg %p255
      // Predicated region
      $region37: #{tpu_custom_call.1} parent=5 // pred_check
        _
      $region38: #{tpu_custom_call.1} parent=5 // pred_check_branch
        %258 = sbr.rel (%p255) target = $region40
      $region39: #{tpu_custom_call.1} parent=5 // pred_region
        %s259 = ssub.s32 %s18, 1
        %s260 = sand.u32 %s43, 1
        %s261 = scalar_lea.sflag [#allocation3], %s260
        %s262 = sand.u32 %s43, 1
        %s263 = smul.addr %s262, 8
        %s264 = scalar_lea.vmem [#allocation2], %s263
        // Predicated region
        $region41: #{tpu_custom_call.1} parent=39 // pred_check
          %p265 = pneg %p56
        $region42: #{tpu_custom_call.1} parent=39 // pred_check_branch
          %267 = sbr.rel (%p265) target = $region44
        $region43: #{tpu_custom_call.1} parent=39 // pred_region
          %269 = dma.done %s261, 128
        $region44: #{tpu_custom_call.1} parent=39 // pred_fallthru
          _
        // Predicated region
        $region45: #{tpu_custom_call.1} parent=39 // pred_check
          %p270 = pneg %p77
        $region46: #{tpu_custom_call.1} parent=39 // pred_check_branch
          %272 = sbr.rel (%p270) target = $region48
        $region47: #{tpu_custom_call.1} parent=39 // pred_region
          %274 = dma.done [#allocation6], 16
        $region48: #{tpu_custom_call.1} parent=39 // pred_fallthru
          _
        // Predicated region
        $region49: #{tpu_custom_call.1} parent=39 // pred_check
          %p275 = pneg %p124
        $region50: #{tpu_custom_call.1} parent=39 // pred_check_branch
          %277 = sbr.rel (%p275) target = $region52
        $region51: #{tpu_custom_call.1} parent=39 // pred_region
          %279 = dma.done [#allocation6], 512
        $region52: #{tpu_custom_call.1} parent=39 // pred_fallthru
          _
        %s280 = sand.u32 %s43, 1
        %s281 = scalar_lea.sflag [#allocation3], %s280
        %s282 = sand.u32 %s43, 1
        %s283 = smul.addr %s282, 8
        %s284 = scalar_lea.vmem [#allocation2], %s283
        %p285 = pneg %p56
        %p286 = pneg %p53
        %p287 = pneg %p77
        %p288 = pneg %p74
        %p289 = pneg %p98
        %p290 = pneg %p95
        %p291 = pneg %p124
        %p292 = pneg %p121
        %p293 = scmp.lt.s32.totalorder %s28, 0
        %s294 = scalar_select %p293, %s28, 0
        %s295 = scalar_lea.vmem %s4, %s294
        %p296 = pneg %p150
        %p297 = pneg %p147
        %p298 = pneg %p178
        %p299 = pneg %p175
        %s300 = sand.u32 %s165, 1
        %s301 = scalar_lea.sflag [#allocation4], %s300
        %s302 = sand.u32 %s165, 1
        %s303 = smul.addr %s302, 8
        %s304 = scalar_lea.vmem [#allocation8], %s303
        %p305 = scmp.lt.s32.totalorder %s28, 0
        %s306 = scalar_select %p305, %s28, 0
        %s307 = scalar_lea.vmem %s4, %s306
        %v308 = vld [vmem:[#allocation5] sm:$0x1]
        %v309 = vld [vmem:[%s2] sm:$0x1]
        %v310 = vld [vmem:[%s307] sm:$0x1]
        %v311 = vld [vmem:[#allocation7] sm:$0xff]
        %v312 = vld [vmem:[#allocation7 + $0x8] sm:$0xff]
        %v313 = vld [vmem:[#allocation7 + $0x10] sm:$0xff]
        %v314 = vld [vmem:[#allocation7 + $0x18] sm:$0xff]
        %v315 = vld [vmem:[%s264] sm:$0xff]
        %vm316 = vcmask 261120
        %v317 = vsel %vm316, %v315, 0.0
        %318 = vadd.xlane.f32.xlu0 %v317
        %v319 = vpop.xlane.xlu0 %318
        %v320 = vmul.f32 %v319, 0.03125
        %v321 = vmul.f32 %v315, %v315
        %v322 = vsel %vm316, %v321, 0.0
        %323 = vadd.xlane.f32.xlu0 %v322
        %v324 = vpop.xlane.xlu0 %323
        %v325 = vmul.f32 %v324, 0.03125
        %v326 = vmul.f32 %v320, %v320
        %v327 = vsub.f32 %v325, %v326
        %v328 = vsub.f32 %v315, %v320
        %v329 = vadd.f32 %v327, 1e-05
        %v330 = vrsqrt.pop %v329
        %v331 = vmul.f32 %v330, %v329
        %v332 = vmul.f32 %v331, %v330
        %v333 = vmul.f32 0.5, %v332
        %v334 = vsub.f32 1.5, %v333
        %v335 = vmul.f32 %v330, %v334
        %vm336 = vweird.f32 %v329
        %vm337 = vweird.f32 %v330
        %vm338 = vmor %vm336, %vm337
        %v339 = vsel %vm338, %v330, %v335
        %v340 = vmul.f32 %v328, %v339
        %v342 = vperm.slane %v308, 0
        %v344 = vmul.f32 %v340, %v342
        %v346 = vperm.slane %v309, 0
        %v348 = vadd.f32 %v344, %v346
        %v350 = vperm.slane %v310, 0
        %v353 = vsel %vm316, %v348, 0
        %355 = vmatpush.msra.mxu0 0.0
        %356 = vmatpush.msra.mxu0 0.0
        %357 = vmatpush.msra.mxu0 0.0
        %358 = vmatpush.msra.mxu0 0.0
        %359 = vmatpush.msra.mxu0 0.0
        %360 = vmatpush.msra.mxu0 0.0
        %361 = vmatpush.msra.mxu0 0.0
        %362 = vmatpush.msra.mxu0 0.0
        %363 = vmatpush.msra.mxu0 0.0
        %364 = vmatpush.msra.mxu0 0.0
        %365 = vmatpush.msra.mxu0 0.0
        %366 = vmatpush.msra.mxu0 0.0
        %v367 = vand.u32 %v314, 4294901760
        %368 = vmatpush.msra.mxu0 %v367
        %v369 = vand.u32 %v313, 4294901760
        %370 = vmatpush.msra.mxu0 %v369
        %v371 = vand.u32 %v312, 4294901760
        %372 = vmatpush.msra.mxu0 %v371
        %v373 = vand.u32 %v311, 4294901760
        %374 = vmatpush.msra.mxu0 %v373
        %v375 = vand.u32 %v353, 4294901760
        %v376 = vsub.f32 %v353, %v375
        %v377 = vand.u32 %v376, 4294901760
        %v378 = vsub.f32 %v376, %v377
        %v379 = vand.u32 %v378, 4294901760
        %380 = vmatmul.f32.gmra.mxu0 %v379
        %v381 = vpop.f32.mrf.mxu0
        %v382 = vadd.f32 %v350, %v381
        %383 = vdwg.mxu0
        %384 = vmatpush.msra.mxu0 0.0
        %385 = vmatpush.msra.mxu0 0.0
        %386 = vmatpush.msra.mxu0 0.0
        %387 = vmatpush.msra.mxu0 0.0
        %388 = vmatpush.msra.mxu0 0.0
        %389 = vmatpush.msra.mxu0 0.0
        %390 = vmatpush.msra.mxu0 0.0
        %391 = vmatpush.msra.mxu0 0.0
        %392 = vmatpush.msra.mxu0 0.0
        %393 = vmatpush.msra.mxu0 0.0
        %394 = vmatpush.msra.mxu0 0.0
        %395 = vmatpush.msra.mxu0 0.0
        %v396 = vand.u32 %v314, 4294901760
        %v397 = vsub.f32 %v314, %v396
        %v398 = vand.u32 %v397, 4294901760
        %v399 = vsub.f32 %v397, %v398
        %v400 = vand.u32 %v399, 4294901760
        %401 = vmatpush.msra.mxu0 %v400
        %v402 = vand.u32 %v313, 4294901760
        %v403 = vsub.f32 %v313, %v402
        %v404 = vand.u32 %v403, 4294901760
        %v405 = vsub.f32 %v403, %v404
        %v406 = vand.u32 %v405, 4294901760
        %407 = vmatpush.msra.mxu0 %v406
        %v408 = vand.u32 %v312, 4294901760
        %v409 = vsub.f32 %v312, %v408
        %v410 = vand.u32 %v409, 4294901760
        %v411 = vsub.f32 %v409, %v410
        %v412 = vand.u32 %v411, 4294901760
        %413 = vmatpush.msra.mxu0 %v412
        %v414 = vand.u32 %v311, 4294901760
        %v415 = vsub.f32 %v311, %v414
        %v416 = vand.u32 %v415, 4294901760
        %v417 = vsub.f32 %v415, %v416
        %v418 = vand.u32 %v417, 4294901760
        %419 = vmatpush.msra.mxu0 %v418
        %v420 = vand.u32 %v353, 4294901760
        %421 = vmatmul.f32.gmra.mxu0 %v420
        %v422 = vpop.f32.mrf.mxu0
        %v423 = vadd.f32 %v382, %v422
        %424 = vdwg.mxu0
        %425 = vmatpush.msra.mxu0 0.0
        %426 = vmatpush.msra.mxu0 0.0
        %427 = vmatpush.msra.mxu0 0.0
        %428 = vmatpush.msra.mxu0 0.0
        %429 = vmatpush.msra.mxu0 0.0
        %430 = vmatpush.msra.mxu0 0.0
        %431 = vmatpush.msra.mxu0 0.0
        %432 = vmatpush.msra.mxu0 0.0
        %433 = vmatpush.msra.mxu0 0.0
        %434 = vmatpush.msra.mxu0 0.0
        %435 = vmatpush.msra.mxu0 0.0
        %436 = vmatpush.msra.mxu0 0.0
        %v437 = vand.u32 %v314, 4294901760
        %v438 = vsub.f32 %v314, %v437
        %439 = vmatpush.msra.mxu0 %v438
        %v440 = vand.u32 %v313, 4294901760
        %v441 = vsub.f32 %v313, %v440
        %442 = vmatpush.msra.mxu0 %v441
        %v443 = vand.u32 %v312, 4294901760
        %v444 = vsub.f32 %v312, %v443
        %445 = vmatpush.msra.mxu0 %v444
        %v446 = vand.u32 %v311, 4294901760
        %v447 = vsub.f32 %v311, %v446
        %448 = vmatpush.msra.mxu0 %v447
        %v449 = vand.u32 %v353, 4294901760
        %v450 = vsub.f32 %v353, %v449
        %451 = vmatmul.f32.gmra.mxu0 %v450
        %v452 = vpop.f32.mrf.mxu0
        %v453 = vadd.f32 %v423, %v452
        %454 = vdwg.mxu0
        %455 = vmatpush.msra.mxu0 0.0
        %456 = vmatpush.msra.mxu0 0.0
        %457 = vmatpush.msra.mxu0 0.0
        %458 = vmatpush.msra.mxu0 0.0
        %459 = vmatpush.msra.mxu0 0.0
        %460 = vmatpush.msra.mxu0 0.0
        %461 = vmatpush.msra.mxu0 0.0
        %462 = vmatpush.msra.mxu0 0.0
        %463 = vmatpush.msra.mxu0 0.0
        %464 = vmatpush.msra.mxu0 0.0
        %465 = vmatpush.msra.mxu0 0.0
        %466 = vmatpush.msra.mxu0 0.0
        %v467 = vand.u32 %v314, 4294901760
        %468 = vmatpush.msra.mxu0 %v467
        %v469 = vand.u32 %v313, 4294901760
        %470 = vmatpush.msra.mxu0 %v469
        %v471 = vand.u32 %v312, 4294901760
        %472 = vmatpush.msra.mxu0 %v471
        %v473 = vand.u32 %v311, 4294901760
        %474 = vmatpush.msra.mxu0 %v473
        %v475 = vand.u32 %v353, 4294901760
        %v476 = vsub.f32 %v353, %v475
        %v477 = vand.u32 %v476, 4294901760
        %478 = vmatmul.f32.gmra.mxu0 %v477
        %v479 = vpop.f32.mrf.mxu0
        %v480 = vadd.f32 %v453, %v479
        %481 = vdwg.mxu0
        %482 = vmatpush.msra.mxu0 0.0
        %483 = vmatpush.msra.mxu0 0.0
        %484 = vmatpush.msra.mxu0 0.0
        %485 = vmatpush.msra.mxu0 0.0
        %486 = vmatpush.msra.mxu0 0.0
        %487 = vmatpush.msra.mxu0 0.0
        %488 = vmatpush.msra.mxu0 0.0
        %489 = vmatpush.msra.mxu0 0.0
        %490 = vmatpush.msra.mxu0 0.0
        %491 = vmatpush.msra.mxu0 0.0
        %492 = vmatpush.msra.mxu0 0.0
        %493 = vmatpush.msra.mxu0 0.0
        %v494 = vand.u32 %v314, 4294901760
        %v495 = vsub.f32 %v314, %v494
        %v496 = vand.u32 %v495, 4294901760
        %497 = vmatpush.msra.mxu0 %v496
        %v498 = vand.u32 %v313, 4294901760
        %v499 = vsub.f32 %v313, %v498
        %v500 = vand.u32 %v499, 4294901760
        %501 = vmatpush.msra.mxu0 %v500
        %v502 = vand.u32 %v312, 4294901760
        %v503 = vsub.f32 %v312, %v502
        %v504 = vand.u32 %v503, 4294901760
        %505 = vmatpush.msra.mxu0 %v504
        %v506 = vand.u32 %v311, 4294901760
        %v507 = vsub.f32 %v311, %v506
        %v508 = vand.u32 %v507, 4294901760
        %509 = vmatpush.msra.mxu0 %v508
        %v510 = vand.u32 %v353, 4294901760
        %511 = vmatmul.f32.gmra.mxu0 %v510
        %v512 = vpop.f32.mrf.mxu0
        %v513 = vadd.f32 %v480, %v512
        %514 = vdwg.mxu0
        %515 = vmatpush.msra.mxu0 0.0
        %516 = vmatpush.msra.mxu0 0.0
        %517 = vmatpush.msra.mxu0 0.0
        %518 = vmatpush.msra.mxu0 0.0
        %519 = vmatpush.msra.mxu0 0.0
        %520 = vmatpush.msra.mxu0 0.0
        %521 = vmatpush.msra.mxu0 0.0
        %522 = vmatpush.msra.mxu0 0.0
        %523 = vmatpush.msra.mxu0 0.0
        %524 = vmatpush.msra.mxu0 0.0
        %525 = vmatpush.msra.mxu0 0.0
        %526 = vmatpush.msra.mxu0 0.0
        %v527 = vand.u32 %v314, 4294901760
        %528 = vmatpush.msra.mxu0 %v527
        %v529 = vand.u32 %v313, 4294901760
        %530 = vmatpush.msra.mxu0 %v529
        %v531 = vand.u32 %v312, 4294901760
        %532 = vmatpush.msra.mxu0 %v531
        %v533 = vand.u32 %v311, 4294901760
        %534 = vmatpush.msra.mxu0 %v533
        %v535 = vand.u32 %v353, 4294901760
        %536 = vmatmul.f32.gmra.mxu0 %v535
        %v537 = vpop.f32.mrf.mxu0
        %v538 = vadd.f32 %v513, %v537
        %539 = vdwg.mxu0
        %540 = vst.msk [vmem:[%s304] sm:$0xff] %vm316, %v538
        %s541 = sand.u32 %s165, 1
        %s542 = scalar_lea.sflag [#allocation4], %s541
        %s543 = sand.u32 %s165, 1
        %s544 = smul.addr %s543, 8
        %s545 = scalar_lea.vmem [#allocation8], %s544
        // Predicated region
        $region53: #{tpu_custom_call.1} parent=39 // pred_check
          %p546 = pneg %p175
        $region54: #{tpu_custom_call.1} parent=39 // pred_check_branch
          %548 = sbr.rel (%p546) target = $region56
        $region55: #{tpu_custom_call.1} parent=39 // pred_region
          %550 = vsyncadd %s542, 0
          %s551 = sadd.s32 %s28, %s27
          %s552 = smul.addr %s551, 8
          %s553 = scalar_lea.hbm %s5, %s552
          %s555 = sshll.u32 %s545, 4
          %s556 = int_to_ptr.vmem [resolvable:$true] %s555
          %s557 = sshll.u32 %s553, 4
          %s558 = int_to_ptr.hbm [resolvable:$true] %s557
          %560 = dma.vmem_to_hbm [thread:$0]  %s556, 128, %s558, %s542
        $region56: #{tpu_custom_call.1} parent=39 // pred_fallthru
          _
      $region40: #{tpu_custom_call.1} parent=5 // pred_fallthru
        _
      %p561 = scmp.le.s32.totalorder 2, %s18
      // Predicated region
      $region57: #{tpu_custom_call.1} parent=5 // pred_check
        %p562 = pneg %p561
      $region58: #{tpu_custom_call.1} parent=5 // pred_check_branch
        %564 = sbr.rel (%p562) target = $region60
      $region59: #{tpu_custom_call.1} parent=5 // pred_region
        %s565 = ssub.s32 %s18, 2
        // Predicated region
        $region61: #{tpu_custom_call.1} parent=59 // pred_check
          %p566 = pneg %p181
        $region62: #{tpu_custom_call.1} parent=59 // pred_check_branch
          %568 = sbr.rel (%p566) target = $region64
        $region63: #{tpu_custom_call.1} parent=59 // pred_region
          %s569 = sand.u32 %s166, 1
          %s570 = scalar_lea.sflag [#allocation4], %s569
          %s571 = sand.u32 %s166, 1
          %s572 = smul.addr %s571, 8
          %s573 = scalar_lea.vmem [#allocation8], %s572
          %575 = dma.done %s570, 128
        $region64: #{tpu_custom_call.1} parent=59 // pred_fallthru
          _
      $region60: #{tpu_custom_call.1} parent=5 // pred_fallthru
        _
    $region6: #{tpu_custom_call.1} parent=1 // loop_footer
      %s22 = sadd.s32 1, %s18
    $region7: #{tpu_custom_call.1} parent=1 // loop_footer_branch
      %17 = sbr.rel target = $region3
    $region8: #{tpu_custom_call.1} parent=1 // loop_exit
      _
    %576 = vsyncpa [#allocation3], 1
    %s577 = scalar_lea.sflag [#allocation3], 1
    %578 = vsyncpa %s577, 1
    %579 = vsyncpa [#allocation6], 1
    %580 = vsyncpa [#allocation4], 1
    %s581 = scalar_lea.sflag [#allocation4], 1
    %582 = vsyncpa %s581, 1

</llo_original>
